<compile_context>
chip_gen: v5e
topology: v5e:2x2
jax: 0.10.0
libtpu: 0.0.40
codegen_flags: <defaults>
</compile_context>

<pallas_src>
import functools

import jax
import jax.numpy as jnp
from jax import lax
from jax.experimental import pallas as pl
from jax.experimental.pallas import tpu as pltpu


def _round_up(x, m):
    return ((x + m - 1) // m) * m


# ---------------------------- fused Pallas kernel ----------------------------

def _lki_kernel(ks1, ks2, pool_ks, P, Pm, *refs):
    nb = len(ks1)
    x_ref, wb_ref, bb_ref = refs[0], refs[1], refs[2]
    br = refs[3:3 + 6 * nb]
    wm_ref, bm_ref = refs[3 + 6 * nb], refs[4 + 6 * nb]
    o_ref = refs[5 + 6 * nb]
    pad_ref = refs[6 + 6 * nb]     # (L + 2P, nf)  zero-padded depthwise scratch
    mpad_ref = refs[7 + 6 * nb]    # (L + 2Pm, ni) -inf padded maxpool scratch

    L = x_ref.shape[1]
    ni = x_ref.shape[2]
    nf = wb_ref.shape[1]

    x = x_ref[0]                                      # (L, ni) -- single HBM read of x

    # ---- bottleneck 1x1 conv (shared by all LKC branches) ----
    y = (jnp.dot(x, wb_ref[...], preferred_element_type=jnp.float32)
         + bb_ref[...])                               # (L, nf)

    # zero only the two pad regions once; the interior is overwritten below and
    # the pad rows never change between depthwise stages / branches.
    zpad = jnp.zeros((P, nf), jnp.float32)
    pad_ref[pl.ds(0, P), :] = zpad
    pad_ref[pl.ds(P + L, P), :] = zpad

    def depthwise(z, w_ref_, b_ref_, k, d):
        # PyTorch Conv1d(dim, dim, k, stride=1, padding='same', groups=dim, dilation=d)
        pad_left = (d * (k - 1)) // 2
        pad_ref[pl.ds(P, L), :] = z
        w = w_ref_[...]                               # (k, nf) read once per stage
        acc = jnp.zeros((L, nf), jnp.float32)
        for j in range(k):                            # small static k -> unrolled taps
            off = j * d - pad_left
            acc = acc + pad_ref[pl.ds(P + off, L), :] * w[j:j + 1, :]
        return acc + b_ref_[...]                      # single bias broadcast

    # ---- LKC branches, each written directly to its output slice ----
    for i in range(nb):
        w1, b1, w2, b2, wp, bp = br[6 * i:6 * i + 6]
        k1 = ks1[i]
        d2 = (k1 + 1) // 2
        z = depthwise(y, w1, b1, k1, 1)               # depthwise_conv
        z = depthwise(z, w2, b2, ks2, d2)             # depthwise_dila_conv
        o_ref[0, i] = (jnp.dot(z, wp[...], preferred_element_type=jnp.float32)
                       + bp[...])                     # pointwise_conv

    # ---- maxconvpool from the already-resident x tile ----
    # TODO(synk): even pool_ks would give length L+1 in PyTorch (stride=1,
    # padding=k//2); this kernel assumes odd pool_ks (length-preserving).
    ninf = jnp.full((Pm, ni), -jnp.inf, jnp.float32)
    mpad_ref[pl.ds(0, Pm), :] = ninf
    mpad_ref[pl.ds(Pm + L, Pm), :] = ninf
    mpad_ref[pl.ds(Pm, L), :] = x
    padm = pool_ks // 2
    pooled = mpad_ref[pl.ds(Pm - padm, L), :]
    for j in range(1, pool_ks):
        pooled = jnp.maximum(pooled, mpad_ref[pl.ds(Pm - padm + j, L), :])
    o_ref[0, nb] = (jnp.dot(pooled, wm_ref[...], preferred_element_type=jnp.float32)
                    + bm_ref[...])


# ---------------------------- wrapper ----------------------------

def lki_forward(x_ncl, params, ks1, ks2, pool_ks):
    """x_ncl: (B, ni, L) -> (B, nf*(len(ks1)+1), L), matching the PyTorch LKI."""
    B, ni, L = x_ncl.shape
    nf = params['bottleneck']['w'].shape[1]
    nb = len(ks1)

    # max 'same' padding needed across all depthwise stages of all branches
    pad_max = 1
    for k1 in ks1:
        d2 = (k1 + 1) // 2
        for k, d in ((k1, 1), (ks2, d2)):
            total = d * (k - 1)
            pad_max = max(pad_max, total // 2, total - total // 2)
    P = _round_up(pad_max, 8)
    Pm = _round_up(max(pool_ks // 2, 1), 8)

    x_blc = jnp.transpose(x_ncl, (0, 2, 1)).astype(jnp.float32)   # (B, L, ni)

    args = [x_blc, params['bottleneck']['w'], params['bottleneck']['b']]
    in_specs = [pl.BlockSpec((1, L, ni), lambda i: (i, 0, 0)),
                pl.BlockSpec((ni, nf), lambda i: (0, 0)),
                pl.BlockSpec((1, nf), lambda i: (0, 0))]
    for bi, k1 in enumerate(ks1):
        p = params['convs'][bi]
        args += [p['w1'], p['b1'], p['w2'], p['b2'], p['wp'], p['bp']]
        in_specs += [pl.BlockSpec((k1, nf), lambda i: (0, 0)),
                     pl.BlockSpec((1, nf), lambda i: (0, 0)),
                     pl.BlockSpec((ks2, nf), lambda i: (0, 0)),
                     pl.BlockSpec((1, nf), lambda i: (0, 0)),
                     pl.BlockSpec((nf, nf), lambda i: (0, 0)),
                     pl.BlockSpec((1, nf), lambda i: (0, 0))]
    args += [params['maxconv']['w'], params['maxconv']['b']]
    in_specs += [pl.BlockSpec((ni, nf), lambda i: (0, 0)),
                 pl.BlockSpec((1, nf), lambda i: (0, 0))]

    kern = functools.partial(_lki_kernel, tuple(ks1), ks2, pool_ks, P, Pm)
    out4 = pl.pallas_call(
        kern,
        out_shape=jax.ShapeDtypeStruct((B, nb + 1, L, nf), jnp.float32),
        grid=(B,),
        in_specs=in_specs,
        out_specs=pl.BlockSpec((1, nb + 1, L, nf), lambda i: (i, 0, 0, 0)),
        scratch_shapes=[pltpu.VMEM((L + 2 * P, nf), jnp.float32),
                        pltpu.VMEM((L + 2 * Pm, ni), jnp.float32)],
        compiler_params=pltpu.CompilerParams(dimension_semantics=("parallel",)),
    )(*args)

    # (B, nb+1, L, nf) -> NCL (B, (nb+1)*nf, L); branch i occupies channel
    # block i, matching torch.cat(..., dim=1) order.
    return out4.transpose(0, 1, 3, 2).reshape(B, (nb + 1) * nf, L)


# ---------------------------- params ----------------------------

def init_params(key, ni, nf, ks1, ks2):
    keys = iter(jax.random.split(key, 4 + 6 * len(ks1)))

    def nrm(shape, scale=0.1):
        return scale * jax.random.normal(next(keys), shape, jnp.float32)

    params = {
        'bottleneck': {'w': nrm((ni, nf)), 'b': nrm((1, nf))},   # Conv1d(ni,nf,1)
        'convs': [],
        'maxconv': {'w': nrm((ni, nf)), 'b': nrm((1, nf))},      # Conv1d(ni,nf,1)
    }
    for k1 in ks1:
        params['convs'].append({
            'w1': nrm((k1, nf)), 'b1': nrm((1, nf)),   # depthwise  (nf,1,k1)
            'w2': nrm((ks2, nf)), 'b2': nrm((1, nf)),  # dilated dw (nf,1,ks2)
            'wp': nrm((nf, nf)), 'bp': nrm((1, nf)),   # pointwise  (nf,nf,1)
        })
    return params


# ---------------------------- plain-JAX reference ----------------------------

def _ref_pointwise(x_ncl, w, b):
    return jnp.einsum('bcl,cf->bfl', x_ncl, w) + b.reshape(1, -1, 1)


def _ref_depthwise(x_ncl, w_kc, b, d):
    k = w_kc.shape[0]
    C = x_ncl.shape[1]
    total = d * (k - 1)
    pad_l, pad_r = total // 2, total - total // 2
    w = jnp.transpose(w_kc, (1, 0)).reshape(C, 1, k)
    out = lax.conv_general_dilated(
        x_ncl, w, window_strides=(1,), padding=[(pad_l, pad_r)],
        rhs_dilation=(d,), dimension_numbers=('NCH', 'OIH', 'NCH'),
        feature_group_count=C)
    return out + b.reshape(1, -1, 1)


def _ref_maxpool(x_ncl, k):
    pad = k // 2
    return lax.reduce_window(x_ncl, -jnp.inf, lax.max, (1, 1, k), (1, 1, 1),
                             [(0, 0), (0, 0), (pad, pad)])


def lki_reference(x_ncl, params, ks1, ks2, pool_ks):
    y = _ref_pointwise(x_ncl, params['bottleneck']['w'], params['bottleneck']['b'])
    outs = []
    for i, k1 in enumerate(ks1):
        p = params['convs'][i]
        d2 = (k1 + 1) // 2
        z = _ref_depthwise(y, p['w1'], p['b1'], 1)
        z = _ref_depthwise(z, p['w2'], p['b2'], d2)
        z = _ref_pointwise(z, p['wp'], p['bp'])
        outs.append(z)
    mp = _ref_maxpool(x_ncl, pool_ks)
    outs.append(_ref_pointwise(mp, params['maxconv']['w'], params['maxconv']['b']))
    return jnp.concatenate(outs, axis=1)


# ---------------------------- main ----------------------------

if __name__ == "__main__":
    B, ni, nf, L = 2, 4, 8, 16
    ks1, ks2, pool_ks = (5, 3), 3, 3          # LKI(ni, nf, ks1, ks2, bias=True)

    key = jax.random.PRNGKey(0)
    kx, kp = jax.random.split(key)
    x = jax.random.normal(kx, (B, ni, L), jnp.float32)
    params = init_params(kp, ni, nf, ks1, ks2)

    out = lki_forward(x, params, ks1, ks2, pool_ks)
    out = jax.block_until_ready(out)

    assert out.shape == (B, nf * (len(ks1) + 1), L), out.shape

    ref = lki_reference(x, params, ks1, ks2, pool_ks)
    err = float(jnp.max(jnp.abs(out - ref)))
    if err > 1e-4:
        raise AssertionError(f"kernel/reference mismatch: max abs err = {err}")

    print("KERNEL_OK")
</pallas_src>

<mosaic_0001>
module attributes {stable_mosaic.version = 11 : i64} {
  func.func @_lki_kernel(%arg0: i32, %arg1: memref<1x16x4xf32, #tpu.memory_space<vmem>>, %arg2: memref<4x8xf32, #tpu.memory_space<vmem>>, %arg3: memref<1x8xf32, #tpu.memory_space<vmem>>, %arg4: memref<5x8xf32, #tpu.memory_space<vmem>>, %arg5: memref<1x8xf32, #tpu.memory_space<vmem>>, %arg6: memref<3x8xf32, #tpu.memory_space<vmem>>, %arg7: memref<1x8xf32, #tpu.memory_space<vmem>>, %arg8: memref<8x8xf32, #tpu.memory_space<vmem>>, %arg9: memref<1x8xf32, #tpu.memory_space<vmem>>, %arg10: memref<3x8xf32, #tpu.memory_space<vmem>>, %arg11: memref<1x8xf32, #tpu.memory_space<vmem>>, %arg12: memref<3x8xf32, #tpu.memory_space<vmem>>, %arg13: memref<1x8xf32, #tpu.memory_space<vmem>>, %arg14: memref<8x8xf32, #tpu.memory_space<vmem>>, %arg15: memref<1x8xf32, #tpu.memory_space<vmem>>, %arg16: memref<4x8xf32, #tpu.memory_space<vmem>>, %arg17: memref<1x8xf32, #tpu.memory_space<vmem>>, %arg18: memref<1x3x16x8xf32, #tpu.memory_space<vmem>>, %arg19: memref<32x8xf32, #tpu.memory_space<vmem>>, %arg20: memref<32x4xf32, #tpu.memory_space<vmem>>) attributes {dimension_semantics = [#tpu.dimension_semantics<parallel>], iteration_bounds = array<i64: 2>, scalar_prefetch = 0 : i64, scratch_operands = 2 : i64, tpu.core_type = #tpu.core_type<tc>, window_params = [{transform_indices = @transform_0, window_bounds = array<i64: 1, 16, 4>}, {pipeline_mode = #tpu.pipeline_mode<synchronous>, transform_indices = @transform_1, window_bounds = array<i64: 4, 8>}, {pipeline_mode = #tpu.pipeline_mode<synchronous>, transform_indices = @transform_2, window_bounds = array<i64: 1, 8>}, {pipeline_mode = #tpu.pipeline_mode<synchronous>, transform_indices = @transform_3, window_bounds = array<i64: 5, 8>}, {pipeline_mode = #tpu.pipeline_mode<synchronous>, transform_indices = @transform_4, window_bounds = array<i64: 1, 8>}, {pipeline_mode = #tpu.pipeline_mode<synchronous>, transform_indices = @transform_5, window_bounds = array<i64: 3, 8>}, {pipeline_mode = #tpu.pipeline_mode<synchronous>, transform_indices = @transform_6, window_bounds = array<i64: 1, 8>}, {pipeline_mode = #tpu.pipeline_mode<synchronous>, transform_indices = @transform_7, window_bounds = array<i64: 8, 8>}, {pipeline_mode = #tpu.pipeline_mode<synchronous>, transform_indices = @transform_8, window_bounds = array<i64: 1, 8>}, {pipeline_mode = #tpu.pipeline_mode<synchronous>, transform_indices = @transform_9, window_bounds = array<i64: 3, 8>}, {pipeline_mode = #tpu.pipeline_mode<synchronous>, transform_indices = @transform_10, window_bounds = array<i64: 1, 8>}, {pipeline_mode = #tpu.pipeline_mode<synchronous>, transform_indices = @transform_11, window_bounds = array<i64: 3, 8>}, {pipeline_mode = #tpu.pipeline_mode<synchronous>, transform_indices = @transform_12, window_bounds = array<i64: 1, 8>}, {pipeline_mode = #tpu.pipeline_mode<synchronous>, transform_indices = @transform_13, window_bounds = array<i64: 8, 8>}, {pipeline_mode = #tpu.pipeline_mode<synchronous>, transform_indices = @transform_14, window_bounds = array<i64: 1, 8>}, {pipeline_mode = #tpu.pipeline_mode<synchronous>, transform_indices = @transform_15, window_bounds = array<i64: 4, 8>}, {pipeline_mode = #tpu.pipeline_mode<synchronous>, transform_indices = @transform_16, window_bounds = array<i64: 1, 8>}, {transform_indices = @transform_17, window_bounds = array<i64: 1, 3, 16, 8>}]} {
    %c0 = arith.constant 0 : index
    %c0_0 = arith.constant 0 : index
    %c0_1 = arith.constant 0 : index
    %0 = vector.load %arg1[%c0, %c0_0, %c0_1] : memref<1x16x4xf32, #tpu.memory_space<vmem>>, vector<1x16x4xf32>
    %1 = vector.shape_cast %0 : vector<1x16x4xf32> to vector<16x4xf32>
    %c0_2 = arith.constant 0 : index
    %c0_3 = arith.constant 0 : index
    %2 = vector.load %arg2[%c0_2, %c0_3] : memref<4x8xf32, #tpu.memory_space<vmem>>, vector<4x8xf32>
    %cst = arith.constant dense<0.000000e+00> : vector<16x8xf32>
    %3 = tpu.matmul %1, %2, %cst {dimension_numbers = #tpu.dot_dimension_numbers<[1], [0], [0], [1], [0, 0, 1, 1], [], []>} : vector<16x4xf32>, vector<4x8xf32>, vector<16x8xf32> -> vector<16x8xf32>
    %c0_4 = arith.constant 0 : index
    %c0_5 = arith.constant 0 : index
    %4 = vector.load %arg3[%c0_4, %c0_5] : memref<1x8xf32, #tpu.memory_space<vmem>>, vector<1x8xf32>
    %5 = vector.broadcast %4 : vector<1x8xf32> to vector<16x8xf32>
    %6 = arith.addf %3, %5 : vector<16x8xf32>
    %cst_6 = arith.constant 0.000000e+00 : f32
    %7 = vector.broadcast %cst_6 : f32 to vector<8x8xf32>
    %c0_7 = arith.constant 0 : index
    %c0_8 = arith.constant 0 : index
    %8 = vector.load %arg19[%c0_7, %c0_8] : memref<32x8xf32, #tpu.memory_space<vmem>>, vector<8x8xf32>
    tpu.vector_store %arg19[%c0_7, %c0_8], %7 {strides = array<i32>} : memref<32x8xf32, #tpu.memory_space<vmem>>, vector<8x8xf32>,
    %c24 = arith.constant 24 : index
    %c0_9 = arith.constant 0 : index
    %9 = vector.load %arg19[%c24, %c0_9] : memref<32x8xf32, #tpu.memory_space<vmem>>, vector<8x8xf32>
    tpu.vector_store %arg19[%c24, %c0_9], %7 {strides = array<i32>} : memref<32x8xf32, #tpu.memory_space<vmem>>, vector<8x8xf32>,
    %c8 = arith.constant 8 : index
    %c0_10 = arith.constant 0 : index
    %10 = vector.load %arg19[%c8, %c0_10] : memref<32x8xf32, #tpu.memory_space<vmem>>, vector<16x8xf32>
    tpu.vector_store %arg19[%c8, %c0_10], %6 {strides = array<i32>} : memref<32x8xf32, #tpu.memory_space<vmem>>, vector<16x8xf32>,
    %c0_11 = arith.constant 0 : index
    %c0_12 = arith.constant 0 : index
    %11 = vector.load %arg4[%c0_11, %c0_12] : memref<5x8xf32, #tpu.memory_space<vmem>>, vector<5x8xf32>
    %cst_13 = arith.constant 0.000000e+00 : f32
    %12 = vector.broadcast %cst_13 : f32 to vector<16x8xf32>
    %c6 = arith.constant 6 : index
    %c0_14 = arith.constant 0 : index
    %13 = vector.load %arg19[%c6, %c0_14] : memref<32x8xf32, #tpu.memory_space<vmem>>, vector<16x8xf32>
    %14 = vector.extract_strided_slice %11 {offsets = [0, 0], sizes = [1, 8], strides = [1, 1]} : vector<5x8xf32> to vector<1x8xf32>
    %15 = vector.broadcast %14 : vector<1x8xf32> to vector<16x8xf32>
    %16 = arith.mulf %13, %15 : vector<16x8xf32>
    %17 = arith.addf %12, %16 : vector<16x8xf32>
    %c7 = arith.constant 7 : index
    %c0_15 = arith.constant 0 : index
    %18 = vector.load %arg19[%c7, %c0_15] : memref<32x8xf32, #tpu.memory_space<vmem>>, vector<16x8xf32>
    %19 = vector.extract_strided_slice %11 {offsets = [1, 0], sizes = [1, 8], strides = [1, 1]} : vector<5x8xf32> to vector<1x8xf32>
    %20 = vector.broadcast %19 : vector<1x8xf32> to vector<16x8xf32>
    %21 = arith.mulf %18, %20 : vector<16x8xf32>
    %22 = arith.addf %17, %21 : vector<16x8xf32>
    %c8_16 = arith.constant 8 : index
    %c0_17 = arith.constant 0 : index
    %23 = vector.load %arg19[%c8_16, %c0_17] : memref<32x8xf32, #tpu.memory_space<vmem>>, vector<16x8xf32>
    %24 = vector.extract_strided_slice %11 {offsets = [2, 0], sizes = [1, 8], strides = [1, 1]} : vector<5x8xf32> to vector<1x8xf32>
    %25 = vector.broadcast %24 : vector<1x8xf32> to vector<16x8xf32>
    %26 = arith.mulf %23, %25 : vector<16x8xf32>
    %27 = arith.addf %22, %26 : vector<16x8xf32>
    %c9 = arith.constant 9 : index
    %c0_18 = arith.constant 0 : index
    %28 = vector.load %arg19[%c9, %c0_18] : memref<32x8xf32, #tpu.memory_space<vmem>>, vector<16x8xf32>
    %29 = vector.extract_strided_slice %11 {offsets = [3, 0], sizes = [1, 8], strides = [1, 1]} : vector<5x8xf32> to vector<1x8xf32>
    %30 = vector.broadcast %29 : vector<1x8xf32> to vector<16x8xf32>
    %31 = arith.mulf %28, %30 : vector<16x8xf32>
    %32 = arith.addf %27, %31 : vector<16x8xf32>
    %c10 = arith.constant 10 : index
    %c0_19 = arith.constant 0 : index
    %33 = vector.load %arg19[%c10, %c0_19] : memref<32x8xf32, #tpu.memory_space<vmem>>, vector<16x8xf32>
    %34 = vector.extract_strided_slice %11 {offsets = [4, 0], sizes = [1, 8], strides = [1, 1]} : vector<5x8xf32> to vector<1x8xf32>
    %35 = vector.broadcast %34 : vector<1x8xf32> to vector<16x8xf32>
    %36 = arith.mulf %33, %35 : vector<16x8xf32>
    %37 = arith.addf %32, %36 : vector<16x8xf32>
    %c0_20 = arith.constant 0 : index
    %c0_21 = arith.constant 0 : index
    %38 = vector.load %arg5[%c0_20, %c0_21] : memref<1x8xf32, #tpu.memory_space<vmem>>, vector<1x8xf32>
    %39 = vector.broadcast %38 : vector<1x8xf32> to vector<16x8xf32>
    %40 = arith.addf %37, %39 : vector<16x8xf32>
    %c8_22 = arith.constant 8 : index
    %c0_23 = arith.constant 0 : index
    %41 = vector.load %arg19[%c8_22, %c0_23] : memref<32x8xf32, #tpu.memory_space<vmem>>, vector<16x8xf32>
    tpu.vector_store %arg19[%c8_22, %c0_23], %40 {strides = array<i32>} : memref<32x8xf32, #tpu.memory_space<vmem>>, vector<16x8xf32>,
    %c0_24 = arith.constant 0 : index
    %c0_25 = arith.constant 0 : index
    %42 = vector.load %arg6[%c0_24, %c0_25] : memref<3x8xf32, #tpu.memory_space<vmem>>, vector<3x8xf32>
    %cst_26 = arith.constant 0.000000e+00 : f32
    %43 = vector.broadcast %cst_26 : f32 to vector<16x8xf32>
    %c5 = arith.constant 5 : index
    %c0_27 = arith.constant 0 : index
    %44 = vector.load %arg19[%c5, %c0_27] : memref<32x8xf32, #tpu.memory_space<vmem>>, vector<16x8xf32>
    %45 = vector.extract_strided_slice %42 {offsets = [0, 0], sizes = [1, 8], strides = [1, 1]} : vector<3x8xf32> to vector<1x8xf32>
    %46 = vector.broadcast %45 : vector<1x8xf32> to vector<16x8xf32>
    %47 = arith.mulf %44, %46 : vector<16x8xf32>
    %48 = arith.addf %43, %47 : vector<16x8xf32>
    %c8_28 = arith.constant 8 : index
    %c0_29 = arith.constant 0 : index
    %49 = vector.load %arg19[%c8_28, %c0_29] : memref<32x8xf32, #tpu.memory_space<vmem>>, vector<16x8xf32>
    %50 = vector.extract_strided_slice %42 {offsets = [1, 0], sizes = [1, 8], strides = [1, 1]} : vector<3x8xf32> to vector<1x8xf32>
    %51 = vector.broadcast %50 : vector<1x8xf32> to vector<16x8xf32>
    %52 = arith.mulf %49, %51 : vector<16x8xf32>
    %53 = arith.addf %48, %52 : vector<16x8xf32>
    %c11 = arith.constant 11 : index
    %c0_30 = arith.constant 0 : index
    %54 = vector.load %arg19[%c11, %c0_30] : memref<32x8xf32, #tpu.memory_space<vmem>>, vector<16x8xf32>
    %55 = vector.extract_strided_slice %42 {offsets = [2, 0], sizes = [1, 8], strides = [1, 1]} : vector<3x8xf32> to vector<1x8xf32>
    %56 = vector.broadcast %55 : vector<1x8xf32> to vector<16x8xf32>
    %57 = arith.mulf %54, %56 : vector<16x8xf32>
    %58 = arith.addf %53, %57 : vector<16x8xf32>
    %c0_31 = arith.constant 0 : index
    %c0_32 = arith.constant 0 : index
    %59 = vector.load %arg7[%c0_31, %c0_32] : memref<1x8xf32, #tpu.memory_space<vmem>>, vector<1x8xf32>
    %60 = vector.broadcast %59 : vector<1x8xf32> to vector<16x8xf32>
    %61 = arith.addf %58, %60 : vector<16x8xf32>
    %c0_33 = arith.constant 0 : index
    %c0_34 = arith.constant 0 : index
    %62 = vector.load %arg8[%c0_33, %c0_34] : memref<8x8xf32, #tpu.memory_space<vmem>>, vector<8x8xf32>
    %cst_35 = arith.constant dense<0.000000e+00> : vector<16x8xf32>
    %63 = tpu.matmul %61, %62, %cst_35 {dimension_numbers = #tpu.dot_dimension_numbers<[1], [0], [0], [1], [0, 0, 1, 1], [], []>} : vector<16x8xf32>, vector<8x8xf32>, vector<16x8xf32> -> vector<16x8xf32>
    %c0_36 = arith.constant 0 : index
    %c0_37 = arith.constant 0 : index
    %64 = vector.load %arg9[%c0_36, %c0_37] : memref<1x8xf32, #tpu.memory_space<vmem>>, vector<1x8xf32>
    %65 = vector.broadcast %64 : vector<1x8xf32> to vector<16x8xf32>
    %66 = arith.addf %63, %65 : vector<16x8xf32>
    %c0_38 = arith.constant 0 : index
    %c0_39 = arith.constant 0 : index
    %c0_40 = arith.constant 0 : index
    %c0_41 = arith.constant 0 : index
    %67 = vector.load %arg18[%c0_38, %c0_39, %c0_40, %c0_41] : memref<1x3x16x8xf32, #tpu.memory_space<vmem>>, vector<1x1x16x8xf32>
    %68 = vector.shape_cast %67 : vector<1x1x16x8xf32> to vector<16x8xf32>
    %69 = vector.shape_cast %66 : vector<16x8xf32> to vector<1x1x16x8xf32>
    tpu.vector_store %arg18[%c0_38, %c0_39, %c0_40, %c0_41], %69 {strides = array<i32>} : memref<1x3x16x8xf32, #tpu.memory_space<vmem>>, vector<1x1x16x8xf32>,
    %c8_42 = arith.constant 8 : index
    %c0_43 = arith.constant 0 : index
    %70 = vector.load %arg19[%c8_42, %c0_43] : memref<32x8xf32, #tpu.memory_space<vmem>>, vector<16x8xf32>
    tpu.vector_store %arg19[%c8_42, %c0_43], %6 {strides = array<i32>} : memref<32x8xf32, #tpu.memory_space<vmem>>, vector<16x8xf32>,
    %c0_44 = arith.constant 0 : index
    %c0_45 = arith.constant 0 : index
    %71 = vector.load %arg10[%c0_44, %c0_45] : memref<3x8xf32, #tpu.memory_space<vmem>>, vector<3x8xf32>
    %cst_46 = arith.constant 0.000000e+00 : f32
    %72 = vector.broadcast %cst_46 : f32 to vector<16x8xf32>
    %c7_47 = arith.constant 7 : index
    %c0_48 = arith.constant 0 : index
    %73 = vector.load %arg19[%c7_47, %c0_48] : memref<32x8xf32, #tpu.memory_space<vmem>>, vector<16x8xf32>
    %74 = vector.extract_strided_slice %71 {offsets = [0, 0], sizes = [1, 8], strides = [1, 1]} : vector<3x8xf32> to vector<1x8xf32>
    %75 = vector.broadcast %74 : vector<1x8xf32> to vector<16x8xf32>
    %76 = arith.mulf %73, %75 : vector<16x8xf32>
    %77 = arith.addf %72, %76 : vector<16x8xf32>
    %c8_49 = arith.constant 8 : index
    %c0_50 = arith.constant 0 : index
    %78 = vector.load %arg19[%c8_49, %c0_50] : memref<32x8xf32, #tpu.memory_space<vmem>>, vector<16x8xf32>
    %79 = vector.extract_strided_slice %71 {offsets = [1, 0], sizes = [1, 8], strides = [1, 1]} : vector<3x8xf32> to vector<1x8xf32>
    %80 = vector.broadcast %79 : vector<1x8xf32> to vector<16x8xf32>
    %81 = arith.mulf %78, %80 : vector<16x8xf32>
    %82 = arith.addf %77, %81 : vector<16x8xf32>
    %c9_51 = arith.constant 9 : index
    %c0_52 = arith.constant 0 : index
    %83 = vector.load %arg19[%c9_51, %c0_52] : memref<32x8xf32, #tpu.memory_space<vmem>>, vector<16x8xf32>
    %84 = vector.extract_strided_slice %71 {offsets = [2, 0], sizes = [1, 8], strides = [1, 1]} : vector<3x8xf32> to vector<1x8xf32>
    %85 = vector.broadcast %84 : vector<1x8xf32> to vector<16x8xf32>
    %86 = arith.mulf %83, %85 : vector<16x8xf32>
    %87 = arith.addf %82, %86 : vector<16x8xf32>
    %c0_53 = arith.constant 0 : index
    %c0_54 = arith.constant 0 : index
    %88 = vector.load %arg11[%c0_53, %c0_54] : memref<1x8xf32, #tpu.memory_space<vmem>>, vector<1x8xf32>
    %89 = vector.broadcast %88 : vector<1x8xf32> to vector<16x8xf32>
    %90 = arith.addf %87, %89 : vector<16x8xf32>
    %c8_55 = arith.constant 8 : index
    %c0_56 = arith.constant 0 : index
    %91 = vector.load %arg19[%c8_55, %c0_56] : memref<32x8xf32, #tpu.memory_space<vmem>>, vector<16x8xf32>
    tpu.vector_store %arg19[%c8_55, %c0_56], %90 {strides = array<i32>} : memref<32x8xf32, #tpu.memory_space<vmem>>, vector<16x8xf32>,
    %c0_57 = arith.constant 0 : index
    %c0_58 = arith.constant 0 : index
    %92 = vector.load %arg12[%c0_57, %c0_58] : memref<3x8xf32, #tpu.memory_space<vmem>>, vector<3x8xf32>
    %cst_59 = arith.constant 0.000000e+00 : f32
    %93 = vector.broadcast %cst_59 : f32 to vector<16x8xf32>
    %c6_60 = arith.constant 6 : index
    %c0_61 = arith.constant 0 : index
    %94 = vector.load %arg19[%c6_60, %c0_61] : memref<32x8xf32, #tpu.memory_space<vmem>>, vector<16x8xf32>
    %95 = vector.extract_strided_slice %92 {offsets = [0, 0], sizes = [1, 8], strides = [1, 1]} : vector<3x8xf32> to vector<1x8xf32>
    %96 = vector.broadcast %95 : vector<1x8xf32> to vector<16x8xf32>
    %97 = arith.mulf %94, %96 : vector<16x8xf32>
    %98 = arith.addf %93, %97 : vector<16x8xf32>
    %c8_62 = arith.constant 8 : index
    %c0_63 = arith.constant 0 : index
    %99 = vector.load %arg19[%c8_62, %c0_63] : memref<32x8xf32, #tpu.memory_space<vmem>>, vector<16x8xf32>
    %100 = vector.extract_strided_slice %92 {offsets = [1, 0], sizes = [1, 8], strides = [1, 1]} : vector<3x8xf32> to vector<1x8xf32>
    %101 = vector.broadcast %100 : vector<1x8xf32> to vector<16x8xf32>
    %102 = arith.mulf %99, %101 : vector<16x8xf32>
    %103 = arith.addf %98, %102 : vector<16x8xf32>
    %c10_64 = arith.constant 10 : index
    %c0_65 = arith.constant 0 : index
    %104 = vector.load %arg19[%c10_64, %c0_65] : memref<32x8xf32, #tpu.memory_space<vmem>>, vector<16x8xf32>
    %105 = vector.extract_strided_slice %92 {offsets = [2, 0], sizes = [1, 8], strides = [1, 1]} : vector<3x8xf32> to vector<1x8xf32>
    %106 = vector.broadcast %105 : vector<1x8xf32> to vector<16x8xf32>
    %107 = arith.mulf %104, %106 : vector<16x8xf32>
    %108 = arith.addf %103, %107 : vector<16x8xf32>
    %c0_66 = arith.constant 0 : index
    %c0_67 = arith.constant 0 : index
    %109 = vector.load %arg13[%c0_66, %c0_67] : memref<1x8xf32, #tpu.memory_space<vmem>>, vector<1x8xf32>
    %110 = vector.broadcast %109 : vector<1x8xf32> to vector<16x8xf32>
    %111 = arith.addf %108, %110 : vector<16x8xf32>
    %c0_68 = arith.constant 0 : index
    %c0_69 = arith.constant 0 : index
    %112 = vector.load %arg14[%c0_68, %c0_69] : memref<8x8xf32, #tpu.memory_space<vmem>>, vector<8x8xf32>
    %cst_70 = arith.constant dense<0.000000e+00> : vector<16x8xf32>
    %113 = tpu.matmul %111, %112, %cst_70 {dimension_numbers = #tpu.dot_dimension_numbers<[1], [0], [0], [1], [0, 0, 1, 1], [], []>} : vector<16x8xf32>, vector<8x8xf32>, vector<16x8xf32> -> vector<16x8xf32>
    %c0_71 = arith.constant 0 : index
    %c0_72 = arith.constant 0 : index
    %114 = vector.load %arg15[%c0_71, %c0_72] : memref<1x8xf32, #tpu.memory_space<vmem>>, vector<1x8xf32>
    %115 = vector.broadcast %114 : vector<1x8xf32> to vector<16x8xf32>
    %116 = arith.addf %113, %115 : vector<16x8xf32>
    %c0_73 = arith.constant 0 : index
    %c1 = arith.constant 1 : index
    %c0_74 = arith.constant 0 : index
    %c0_75 = arith.constant 0 : index
    %117 = vector.load %arg18[%c0_73, %c1, %c0_74, %c0_75] : memref<1x3x16x8xf32, #tpu.memory_space<vmem>>, vector<1x1x16x8xf32>
    %118 = vector.shape_cast %117 : vector<1x1x16x8xf32> to vector<16x8xf32>
    %119 = vector.shape_cast %116 : vector<16x8xf32> to vector<1x1x16x8xf32>
    tpu.vector_store %arg18[%c0_73, %c1, %c0_74, %c0_75], %119 {strides = array<i32>} : memref<1x3x16x8xf32, #tpu.memory_space<vmem>>, vector<1x1x16x8xf32>,
    %cst_76 = arith.constant 0xFF800000 : f32
    %120 = vector.broadcast %cst_76 : f32 to vector<8x4xf32>
    %c0_77 = arith.constant 0 : index
    %c0_78 = arith.constant 0 : index
    %121 = vector.load %arg20[%c0_77, %c0_78] : memref<32x4xf32, #tpu.memory_space<vmem>>, vector<8x4xf32>
    tpu.vector_store %arg20[%c0_77, %c0_78], %120 {strides = array<i32>} : memref<32x4xf32, #tpu.memory_space<vmem>>, vector<8x4xf32>,
    %c24_79 = arith.constant 24 : index
    %c0_80 = arith.constant 0 : index
    %122 = vector.load %arg20[%c24_79, %c0_80] : memref<32x4xf32, #tpu.memory_space<vmem>>, vector<8x4xf32>
    tpu.vector_store %arg20[%c24_79, %c0_80], %120 {strides = array<i32>} : memref<32x4xf32, #tpu.memory_space<vmem>>, vector<8x4xf32>,
    %c8_81 = arith.constant 8 : index
    %c0_82 = arith.constant 0 : index
    %123 = vector.load %arg20[%c8_81, %c0_82] : memref<32x4xf32, #tpu.memory_space<vmem>>, vector<16x4xf32>
    tpu.vector_store %arg20[%c8_81, %c0_82], %1 {strides = array<i32>} : memref<32x4xf32, #tpu.memory_space<vmem>>, vector<16x4xf32>,
    %c7_83 = arith.constant 7 : index
    %c0_84 = arith.constant 0 : index
    %124 = vector.load %arg20[%c7_83, %c0_84] : memref<32x4xf32, #tpu.memory_space<vmem>>, vector<16x4xf32>
    %c8_85 = arith.constant 8 : index
    %c0_86 = arith.constant 0 : index
    %125 = vector.load %arg20[%c8_85, %c0_86] : memref<32x4xf32, #tpu.memory_space<vmem>>, vector<16x4xf32>
    %126 = arith.maximumf %124, %125 : vector<16x4xf32>
    %c9_87 = arith.constant 9 : index
    %c0_88 = arith.constant 0 : index
    %127 = vector.load %arg20[%c9_87, %c0_88] : memref<32x4xf32, #tpu.memory_space<vmem>>, vector<16x4xf32>
    %128 = arith.maximumf %126, %127 : vector<16x4xf32>
    %c0_89 = arith.constant 0 : index
    %c0_90 = arith.constant 0 : index
    %129 = vector.load %arg16[%c0_89, %c0_90] : memref<4x8xf32, #tpu.memory_space<vmem>>, vector<4x8xf32>
    %cst_91 = arith.constant dense<0.000000e+00> : vector<16x8xf32>
    %130 = tpu.matmul %128, %129, %cst_91 {dimension_numbers = #tpu.dot_dimension_numbers<[1], [0], [0], [1], [0, 0, 1, 1], [], []>} : vector<16x4xf32>, vector<4x8xf32>, vector<16x8xf32> -> vector<16x8xf32>
    %c0_92 = arith.constant 0 : index
    %c0_93 = arith.constant 0 : index
    %131 = vector.load %arg17[%c0_92, %c0_93] : memref<1x8xf32, #tpu.memory_space<vmem>>, vector<1x8xf32>
    %132 = vector.broadcast %131 : vector<1x8xf32> to vector<16x8xf32>
    %133 = arith.addf %130, %132 : vector<16x8xf32>
    %c0_94 = arith.constant 0 : index
    %c2 = arith.constant 2 : index
    %c0_95 = arith.constant 0 : index
    %c0_96 = arith.constant 0 : index
    %134 = vector.load %arg18[%c0_94, %c2, %c0_95, %c0_96] : memref<1x3x16x8xf32, #tpu.memory_space<vmem>>, vector<1x1x16x8xf32>
    %135 = vector.shape_cast %134 : vector<1x1x16x8xf32> to vector<16x8xf32>
    %136 = vector.shape_cast %133 : vector<16x8xf32> to vector<1x1x16x8xf32>
    tpu.vector_store %arg18[%c0_94, %c2, %c0_95, %c0_96], %136 {strides = array<i32>} : memref<1x3x16x8xf32, #tpu.memory_space<vmem>>, vector<1x1x16x8xf32>,
    return
  }
  func.func @transform_0(%arg0: i32) -> (i32, i32, i32) {
    %c0_i32 = arith.constant 0 : i32
    %c0_i32_0 = arith.constant 0 : i32
    %c0_i32_1 = arith.constant 0 : i32
    return %arg0, %c0_i32, %c0_i32_0 : i32, i32, i32
  }
  func.func @transform_1(%arg0: i32) -> (i32, i32) {
    %c0_i32 = arith.constant 0 : i32
    %c0_i32_0 = arith.constant 0 : i32
    %c0_i32_1 = arith.constant 0 : i32
    return %c0_i32, %c0_i32_0 : i32, i32
  }
  func.func @transform_2(%arg0: i32) -> (i32, i32) {
    %c0_i32 = arith.constant 0 : i32
    %c0_i32_0 = arith.constant 0 : i32
    %c0_i32_1 = arith.constant 0 : i32
    return %c0_i32, %c0_i32_0 : i32, i32
  }
  func.func @transform_3(%arg0: i32) -> (i32, i32) {
    %c0_i32 = arith.constant 0 : i32
    %c0_i32_0 = arith.constant 0 : i32
    %c0_i32_1 = arith.constant 0 : i32
    return %c0_i32, %c0_i32_0 : i32, i32
  }
  func.func @transform_4(%arg0: i32) -> (i32, i32) {
    %c0_i32 = arith.constant 0 : i32
    %c0_i32_0 = arith.constant 0 : i32
    %c0_i32_1 = arith.constant 0 : i32
    return %c0_i32, %c0_i32_0 : i32, i32
  }
  func.func @transform_5(%arg0: i32) -> (i32, i32) {
    %c0_i32 = arith.constant 0 : i32
    %c0_i32_0 = arith.constant 0 : i32
    %c0_i32_1 = arith.constant 0 : i32
    return %c0_i32, %c0_i32_0 : i32, i32
  }
  func.func @transform_6(%arg0: i32) -> (i32, i32) {
    %c0_i32 = arith.constant 0 : i32
    %c0_i32_0 = arith.constant 0 : i32
    %c0_i32_1 = arith.constant 0 : i32
    return %c0_i32, %c0_i32_0 : i32, i32
  }
  func.func @transform_7(%arg0: i32) -> (i32, i32) {
    %c0_i32 = arith.constant 0 : i32
    %c0_i32_0 = arith.constant 0 : i32
    %c0_i32_1 = arith.constant 0 : i32
    return %c0_i32, %c0_i32_0 : i32, i32
  }
  func.func @transform_8(%arg0: i32) -> (i32, i32) {
    %c0_i32 = arith.constant 0 : i32
    %c0_i32_0 = arith.constant 0 : i32
    %c0_i32_1 = arith.constant 0 : i32
    return %c0_i32, %c0_i32_0 : i32, i32
  }
  func.func @transform_9(%arg0: i32) -> (i32, i32) {
    %c0_i32 = arith.constant 0 : i32
    %c0_i32_0 = arith.constant 0 : i32
    %c0_i32_1 = arith.constant 0 : i32
    return %c0_i32, %c0_i32_0 : i32, i32
  }
  func.func @transform_10(%arg0: i32) -> (i32, i32) {
    %c0_i32 = arith.constant 0 : i32
    %c0_i32_0 = arith.constant 0 : i32
    %c0_i32_1 = arith.constant 0 : i32
    return %c0_i32, %c0_i32_0 : i32, i32
  }
  func.func @transform_11(%arg0: i32) -> (i32, i32) {
    %c0_i32 = arith.constant 0 : i32
    %c0_i32_0 = arith.constant 0 : i32
    %c0_i32_1 = arith.constant 0 : i32
    return %c0_i32, %c0_i32_0 : i32, i32
  }
  func.func @transform_12(%arg0: i32) -> (i32, i32) {
    %c0_i32 = arith.constant 0 : i32
    %c0_i32_0 = arith.constant 0 : i32
    %c0_i32_1 = arith.constant 0 : i32
    return %c0_i32, %c0_i32_0 : i32, i32
  }
  func.func @transform_13(%arg0: i32) -> (i32, i32) {
    %c0_i32 = arith.constant 0 : i32
    %c0_i32_0 = arith.constant 0 : i32
    %c0_i32_1 = arith.constant 0 : i32
    return %c0_i32, %c0_i32_0 : i32, i32
  }
  func.func @transform_14(%arg0: i32) -> (i32, i32) {
    %c0_i32 = arith.constant 0 : i32
    %c0_i32_0 = arith.constant 0 : i32
    %c0_i32_1 = arith.constant 0 : i32
    return %c0_i32, %c0_i32_0 : i32, i32
  }
  func.func @transform_15(%arg0: i32) -> (i32, i32) {
    %c0_i32 = arith.constant 0 : i32
    %c0_i32_0 = arith.constant 0 : i32
    %c0_i32_1 = arith.constant 0 : i32
    return %c0_i32, %c0_i32_0 : i32, i32
  }
  func.func @transform_16(%arg0: i32) -> (i32, i32) {
    %c0_i32 = arith.constant 0 : i32
    %c0_i32_0 = arith.constant 0 : i32
    %c0_i32_1 = arith.constant 0 : i32
    return %c0_i32, %c0_i32_0 : i32, i32
  }
  func.func @transform_17(%arg0: i32) -> (i32, i32, i32, i32) {
    %c0_i32 = arith.constant 0 : i32
    %c0_i32_0 = arith.constant 0 : i32
    %c0_i32_1 = arith.constant 0 : i32
    %c0_i32_2 = arith.constant 0 : i32
    return %arg0, %c0_i32, %c0_i32_0, %c0_i32_1 : i32, i32, i32, i32
  }
}

</mosaic_0001>

<llo_original>
// kernel: tpu_custom_call.1
$region0: #{tpu_custom_call.1}
  #allocation0 [shape = 'u32[]', space=smem, size = 0x4, offset = 0x4, fixed_abs, tag = 'smem constant byte address 0x4 - core index']
  #allocation1 [shape = 'u32[72,128]{1,0:T(1,128)}', space=vmem, size = 0x9000, scoped, tag = 'internal scratch']
  #allocation2 [shape = 'f32[32,8]{1,0:T(8,128)}', space=vmem, size = 0x4000, scoped, tag = 'scratch operand']
  #allocation3 [shape = 'f32[32,4]{1,0:T(8,128)}', space=vmem, size = 0x4000, scoped, tag = 'scratch operand']
  %s0 = inlined_call_operand.vmem [shape: f32[2,16,4], index: 0, kind: input, shape index: {}]
  %s1 = inlined_call_operand.vmem [shape: f32[4,8], index: 1, kind: input, shape index: {}]
  %s2 = inlined_call_operand.hbm [shape: f32[1,8], index: 2, kind: input, shape index: {}]
  %s3 = inlined_call_operand.vmem [shape: f32[5,8], index: 3, kind: input, shape index: {}]
  %s4 = inlined_call_operand.hbm [shape: f32[1,8], index: 4, kind: input, shape index: {}]
  %s5 = inlined_call_operand.vmem [shape: f32[3,8], index: 5, kind: input, shape index: {}]
  %s6 = inlined_call_operand.vmem [shape: f32[1,8], index: 6, kind: input, shape index: {}]
  %s7 = inlined_call_operand.vmem [shape: f32[8,8], index: 7, kind: input, shape index: {}]
  %s8 = inlined_call_operand.vmem [shape: f32[1,8], index: 8, kind: input, shape index: {}]
  %s9 = inlined_call_operand.vmem [shape: f32[3,8], index: 9, kind: input, shape index: {}]
  %s10 = inlined_call_operand.vmem [shape: f32[1,8], index: 10, kind: input, shape index: {}]
  %s11 = inlined_call_operand.vmem [shape: f32[3,8], index: 11, kind: input, shape index: {}]
  %s12 = inlined_call_operand.vmem [shape: f32[1,8], index: 12, kind: input, shape index: {}]
  %s13 = inlined_call_operand.vmem [shape: f32[8,8], index: 13, kind: input, shape index: {}]
  %s14 = inlined_call_operand.vmem [shape: f32[1,8], index: 14, kind: input, shape index: {}]
  %s15 = inlined_call_operand.vmem [shape: f32[4,8], index: 15, kind: input, shape index: {}]
  %s16 = inlined_call_operand.vmem [shape: f32[1,8], index: 16, kind: input, shape index: {}]
  %s17 = inlined_call_operand.vmem [shape: f32[2,3,16,8], index: 17, kind: output, shape index: {}]
  %s18 = sld [smem:[#allocation0]]
  $region109: #{tpu_custom_call.1} parent=0
    _
  %s20 = ssub.s32 1, %s18
  %s21 = scalar_select 0, %s20, %s18
  $region1: #{tpu_custom_call.1} parent=0
    #allocation4 [shape = 'u8[512]{0}', space=vmem, size = 0x400, scoped, tag = 'input window, operand 2, single buffered']
    #allocation5 [shape = 's32[2]{0}', space=sflag, size = 0x8, scoped, tag = 'scoped memory for tpu_custom_call.1']
    #allocation6 [shape = 'u8[512]{0}', space=vmem, size = 0x400, scoped, tag = 'input window, operand 4, single buffered']
    #allocation7 [shape = 's32[1]{0}', space=sflag, size = 0x4, scoped, tag = 'scoped memory for tpu_custom_call.1']
    %22 = vsyncpa [#allocation5], 0
    %23 = vsyncpa [#allocation7], 0
    loop: start=0, step=1, limit=4
    $region2: #{tpu_custom_call.1} parent=1 // loop_pre_header
      _
    $region3: #{tpu_custom_call.1} parent=1 // loop_header
      %s25 = sphi 0, %s29
      %p26 = scmp.ge.s32.totalorder %s25, 4
      %s35 = sphi 0, %s37
      %s38 = sphi 0, %s35
      %s39 = sphi 0, %s38
      %s55 = sphi 0, %s39
      %s59 = sphi 0, %s59
      %s61 = sphi 0, %s59
      %s62 = sphi 0, %s61
      %s76 = sphi 0, %s62
      %s80 = sphi 0, %s80
      %s82 = sphi 0, %s80
      %s83 = sphi 0, %s82
      %s97 = sphi 0, %s83
      %s101 = sphi 0, %s101
      %s103 = sphi 0, %s101
      %s104 = sphi 0, %s103
      %s118 = sphi 0, %s104
      %s122 = sphi 0, %s122
      %s124 = sphi 0, %s122
      %s125 = sphi 0, %s124
      %s139 = sphi 0, %s125
      %s143 = sphi 0, %s143
      %s145 = sphi 0, %s143
      %s146 = sphi 0, %s145
      %s160 = sphi 0, %s146
      %s164 = sphi 0, %s164
      %s166 = sphi 0, %s164
      %s167 = sphi 0, %s166
      %s181 = sphi 0, %s167
      %s185 = sphi 0, %s185
      %s187 = sphi 0, %s185
      %s188 = sphi 0, %s187
      %s202 = sphi 0, %s188
      %s206 = sphi 0, %s206
      %s208 = sphi 0, %s206
      %s209 = sphi 0, %s208
      %s223 = sphi 0, %s209
      %s227 = sphi 0, %s227
      %s229 = sphi 0, %s227
      %s230 = sphi 0, %s229
      %s244 = sphi 0, %s230
      %s248 = sphi 0, %s248
      %s250 = sphi 0, %s248
      %s251 = sphi 0, %s250
      %s265 = sphi 0, %s251
      %s269 = sphi 0, %s269
      %s271 = sphi 0, %s269
      %s272 = sphi 0, %s271
      %s286 = sphi 0, %s272
      %s290 = sphi 0, %s290
      %s292 = sphi 0, %s290
      %s293 = sphi 0, %s292
      %s307 = sphi 0, %s293
      %s311 = sphi 0, %s311
      %s313 = sphi 0, %s311
      %s314 = sphi 0, %s313
      %s328 = sphi 0, %s314
      %s332 = sphi 0, %s332
      %s334 = sphi 0, %s332
      %s335 = sphi 0, %s334
      %s349 = sphi 0, %s335
      %s353 = sphi 0, %s353
      %s355 = sphi 0, %s353
      %s356 = sphi 0, %s355
      %s370 = sphi 0, %s356
      %s374 = sphi 0, %s374
      %s376 = sphi 0, %s374
      %s377 = sphi 0, %s376
      %s391 = sphi 0, %s377
      %s397 = sphi 0, %s399
      %s400 = sphi 0, %s397
      %s401 = sphi 0, %s400
      %s417 = sphi 0, %s401
    $region4: #{tpu_custom_call.1} parent=1 // loop_header_branch
      %28 = sbr.rel (%p26) target = $region8
    $region5: #{tpu_custom_call.1} parent=1 // loop_body
      %s30 = ssub.s32 %s25, 1
      %s31 = ssub.s32 %s25, 2
      %s32 = sadd.s32 %s25, 1
      %s33 = ssub.s32 %s25, %s32
      %p34 = scmp.eq.s32.totalorder %s33, 0
      %s36 = sadd.s32 %s35, 1
      %s37 = scalar_select %p34, %s35, %s36
      %p40 = pneg %p34
      %p41 = scmp.eq.s32.totalorder %s25, 1
      %p42 = por %p40, %p41
      %p43 = scmp.ne.s32.totalorder %s35, %s38
      %p44 = scmp.eq.s32.totalorder %s25, 0
      %p45 = por %p43, %p44
      %p46 = scmp.ne.s32.totalorder %s35, %s38
      %p47 = scmp.eq.s32.totalorder %s30, 1
      %p48 = por %p46, %p47
      %p49 = scmp.ne.s32.totalorder %s38, %s39
      %p50 = scmp.eq.s32.totalorder %s30, 0
      %p51 = por %p49, %p50
      %p52 = scmp.ne.s32.totalorder %s38, %s39
      %p53 = scmp.eq.s32.totalorder %s31, 1
      %p54 = por %p52, %p53
      %p56 = scmp.ne.s32.totalorder %s39, %s55
      %p57 = scmp.eq.s32.totalorder %s31, 0
      %p58 = por %p56, %p57
      %s60 = sadd.s32 %s59, 1
      %p63 = scmp.eq.s32.totalorder %s25, 1
      %p64 = scmp.ne.s32.totalorder %s59, %s61
      %p65 = scmp.eq.s32.totalorder %s25, 0
      %p66 = por %p64, %p65
      %p67 = scmp.ne.s32.totalorder %s59, %s61
      %p68 = scmp.eq.s32.totalorder %s30, 1
      %p69 = por %p67, %p68
      %p70 = scmp.ne.s32.totalorder %s61, %s62
      %p71 = scmp.eq.s32.totalorder %s30, 0
      %p72 = por %p70, %p71
      %p73 = scmp.ne.s32.totalorder %s61, %s62
      %p74 = scmp.eq.s32.totalorder %s31, 1
      %p75 = por %p73, %p74
      %p77 = scmp.ne.s32.totalorder %s62, %s76
      %p78 = scmp.eq.s32.totalorder %s31, 0
      %p79 = por %p77, %p78
      %s81 = sadd.s32 %s80, 1
      %p84 = scmp.eq.s32.totalorder %s25, 1
      %p85 = scmp.ne.s32.totalorder %s80, %s82
      %p86 = scmp.eq.s32.totalorder %s25, 0
      %p87 = por %p85, %p86
      %p88 = scmp.ne.s32.totalorder %s80, %s82
      %p89 = scmp.eq.s32.totalorder %s30, 1
      %p90 = por %p88, %p89
      %p91 = scmp.ne.s32.totalorder %s82, %s83
      %p92 = scmp.eq.s32.totalorder %s30, 0
      %p93 = por %p91, %p92
      %p94 = scmp.ne.s32.totalorder %s82, %s83
      %p95 = scmp.eq.s32.totalorder %s31, 1
      %p96 = por %p94, %p95
      %p98 = scmp.ne.s32.totalorder %s83, %s97
      %p99 = scmp.eq.s32.totalorder %s31, 0
      %p100 = por %p98, %p99
      %s102 = sadd.s32 %s101, 1
      %p105 = scmp.eq.s32.totalorder %s25, 1
      %p106 = scmp.ne.s32.totalorder %s101, %s103
      %p107 = scmp.eq.s32.totalorder %s25, 0
      %p108 = por %p106, %p107
      %p109 = scmp.ne.s32.totalorder %s101, %s103
      %p110 = scmp.eq.s32.totalorder %s30, 1
      %p111 = por %p109, %p110
      %p112 = scmp.ne.s32.totalorder %s103, %s104
      %p113 = scmp.eq.s32.totalorder %s30, 0
      %p114 = por %p112, %p113
      %p115 = scmp.ne.s32.totalorder %s103, %s104
      %p116 = scmp.eq.s32.totalorder %s31, 1
      %p117 = por %p115, %p116
      %p119 = scmp.ne.s32.totalorder %s104, %s118
      %p120 = scmp.eq.s32.totalorder %s31, 0
      %p121 = por %p119, %p120
      %s123 = sadd.s32 %s122, 1
      %p126 = scmp.eq.s32.totalorder %s25, 1
      %p127 = scmp.ne.s32.totalorder %s122, %s124
      %p128 = scmp.eq.s32.totalorder %s25, 0
      %p129 = por %p127, %p128
      %p130 = scmp.ne.s32.totalorder %s122, %s124
      %p131 = scmp.eq.s32.totalorder %s30, 1
      %p132 = por %p130, %p131
      %p133 = scmp.ne.s32.totalorder %s124, %s125
      %p134 = scmp.eq.s32.totalorder %s30, 0
      %p135 = por %p133, %p134
      %p136 = scmp.ne.s32.totalorder %s124, %s125
      %p137 = scmp.eq.s32.totalorder %s31, 1
      %p138 = por %p136, %p137
      %p140 = scmp.ne.s32.totalorder %s125, %s139
      %p141 = scmp.eq.s32.totalorder %s31, 0
      %p142 = por %p140, %p141
      %s144 = sadd.s32 %s143, 1
      %p147 = scmp.eq.s32.totalorder %s25, 1
      %p148 = scmp.ne.s32.totalorder %s143, %s145
      %p149 = scmp.eq.s32.totalorder %s25, 0
      %p150 = por %p148, %p149
      %p151 = scmp.ne.s32.totalorder %s143, %s145
      %p152 = scmp.eq.s32.totalorder %s30, 1
      %p153 = por %p151, %p152
      %p154 = scmp.ne.s32.totalorder %s145, %s146
      %p155 = scmp.eq.s32.totalorder %s30, 0
      %p156 = por %p154, %p155
      %p157 = scmp.ne.s32.totalorder %s145, %s146
      %p158 = scmp.eq.s32.totalorder %s31, 1
      %p159 = por %p157, %p158
      %p161 = scmp.ne.s32.totalorder %s146, %s160
      %p162 = scmp.eq.s32.totalorder %s31, 0
      %p163 = por %p161, %p162
      %s165 = sadd.s32 %s164, 1
      %p168 = scmp.eq.s32.totalorder %s25, 1
      %p169 = scmp.ne.s32.totalorder %s164, %s166
      %p170 = scmp.eq.s32.totalorder %s25, 0
      %p171 = por %p169, %p170
      %p172 = scmp.ne.s32.totalorder %s164, %s166
      %p173 = scmp.eq.s32.totalorder %s30, 1
      %p174 = por %p172, %p173
      %p175 = scmp.ne.s32.totalorder %s166, %s167
      %p176 = scmp.eq.s32.totalorder %s30, 0
      %p177 = por %p175, %p176
      %p178 = scmp.ne.s32.totalorder %s166, %s167
      %p179 = scmp.eq.s32.totalorder %s31, 1
      %p180 = por %p178, %p179
      %p182 = scmp.ne.s32.totalorder %s167, %s181
      %p183 = scmp.eq.s32.totalorder %s31, 0
      %p184 = por %p182, %p183
      %s186 = sadd.s32 %s185, 1
      %p189 = scmp.eq.s32.totalorder %s25, 1
      %p190 = scmp.ne.s32.totalorder %s185, %s187
      %p191 = scmp.eq.s32.totalorder %s25, 0
      %p192 = por %p190, %p191
      %p193 = scmp.ne.s32.totalorder %s185, %s187
      %p194 = scmp.eq.s32.totalorder %s30, 1
      %p195 = por %p193, %p194
      %p196 = scmp.ne.s32.totalorder %s187, %s188
      %p197 = scmp.eq.s32.totalorder %s30, 0
      %p198 = por %p196, %p197
      %p199 = scmp.ne.s32.totalorder %s187, %s188
      %p200 = scmp.eq.s32.totalorder %s31, 1
      %p201 = por %p199, %p200
      %p203 = scmp.ne.s32.totalorder %s188, %s202
      %p204 = scmp.eq.s32.totalorder %s31, 0
      %p205 = por %p203, %p204
      %s207 = sadd.s32 %s206, 1
      %p210 = scmp.eq.s32.totalorder %s25, 1
      %p211 = scmp.ne.s32.totalorder %s206, %s208
      %p212 = scmp.eq.s32.totalorder %s25, 0
      %p213 = por %p211, %p212
      %p214 = scmp.ne.s32.totalorder %s206, %s208
      %p215 = scmp.eq.s32.totalorder %s30, 1
      %p216 = por %p214, %p215
      %p217 = scmp.ne.s32.totalorder %s208, %s209
      %p218 = scmp.eq.s32.totalorder %s30, 0
      %p219 = por %p217, %p218
      %p220 = scmp.ne.s32.totalorder %s208, %s209
      %p221 = scmp.eq.s32.totalorder %s31, 1
      %p222 = por %p220, %p221
      %p224 = scmp.ne.s32.totalorder %s209, %s223
      %p225 = scmp.eq.s32.totalorder %s31, 0
      %p226 = por %p224, %p225
      %s228 = sadd.s32 %s227, 1
      %p231 = scmp.eq.s32.totalorder %s25, 1
      %p232 = scmp.ne.s32.totalorder %s227, %s229
      %p233 = scmp.eq.s32.totalorder %s25, 0
      %p234 = por %p232, %p233
      %p235 = scmp.ne.s32.totalorder %s227, %s229
      %p236 = scmp.eq.s32.totalorder %s30, 1
      %p237 = por %p235, %p236
      %p238 = scmp.ne.s32.totalorder %s229, %s230
      %p239 = scmp.eq.s32.totalorder %s30, 0
      %p240 = por %p238, %p239
      %p241 = scmp.ne.s32.totalorder %s229, %s230
      %p242 = scmp.eq.s32.totalorder %s31, 1
      %p243 = por %p241, %p242
      %p245 = scmp.ne.s32.totalorder %s230, %s244
      %p246 = scmp.eq.s32.totalorder %s31, 0
      %p247 = por %p245, %p246
      %s249 = sadd.s32 %s248, 1
      %p252 = scmp.eq.s32.totalorder %s25, 1
      %p253 = scmp.ne.s32.totalorder %s248, %s250
      %p254 = scmp.eq.s32.totalorder %s25, 0
      %p255 = por %p253, %p254
      %p256 = scmp.ne.s32.totalorder %s248, %s250
      %p257 = scmp.eq.s32.totalorder %s30, 1
      %p258 = por %p256, %p257
      %p259 = scmp.ne.s32.totalorder %s250, %s251
      %p260 = scmp.eq.s32.totalorder %s30, 0
      %p261 = por %p259, %p260
      %p262 = scmp.ne.s32.totalorder %s250, %s251
      %p263 = scmp.eq.s32.totalorder %s31, 1
      %p264 = por %p262, %p263
      %p266 = scmp.ne.s32.totalorder %s251, %s265
      %p267 = scmp.eq.s32.totalorder %s31, 0
      %p268 = por %p266, %p267
      %s270 = sadd.s32 %s269, 1
      %p273 = scmp.eq.s32.totalorder %s25, 1
      %p274 = scmp.ne.s32.totalorder %s269, %s271
      %p275 = scmp.eq.s32.totalorder %s25, 0
      %p276 = por %p274, %p275
      %p277 = scmp.ne.s32.totalorder %s269, %s271
      %p278 = scmp.eq.s32.totalorder %s30, 1
      %p279 = por %p277, %p278
      %p280 = scmp.ne.s32.totalorder %s271, %s272
      %p281 = scmp.eq.s32.totalorder %s30, 0
      %p282 = por %p280, %p281
      %p283 = scmp.ne.s32.totalorder %s271, %s272
      %p284 = scmp.eq.s32.totalorder %s31, 1
      %p285 = por %p283, %p284
      %p287 = scmp.ne.s32.totalorder %s272, %s286
      %p288 = scmp.eq.s32.totalorder %s31, 0
      %p289 = por %p287, %p288
      %s291 = sadd.s32 %s290, 1
      %p294 = scmp.eq.s32.totalorder %s25, 1
      %p295 = scmp.ne.s32.totalorder %s290, %s292
      %p296 = scmp.eq.s32.totalorder %s25, 0
      %p297 = por %p295, %p296
      %p298 = scmp.ne.s32.totalorder %s290, %s292
      %p299 = scmp.eq.s32.totalorder %s30, 1
      %p300 = por %p298, %p299
      %p301 = scmp.ne.s32.totalorder %s292, %s293
      %p302 = scmp.eq.s32.totalorder %s30, 0
      %p303 = por %p301, %p302
      %p304 = scmp.ne.s32.totalorder %s292, %s293
      %p305 = scmp.eq.s32.totalorder %s31, 1
      %p306 = por %p304, %p305
      %p308 = scmp.ne.s32.totalorder %s293, %s307
      %p309 = scmp.eq.s32.totalorder %s31, 0
      %p310 = por %p308, %p309
      %s312 = sadd.s32 %s311, 1
      %p315 = scmp.eq.s32.totalorder %s25, 1
      %p316 = scmp.ne.s32.totalorder %s311, %s313
      %p317 = scmp.eq.s32.totalorder %s25, 0
      %p318 = por %p316, %p317
      %p319 = scmp.ne.s32.totalorder %s311, %s313
      %p320 = scmp.eq.s32.totalorder %s30, 1
      %p321 = por %p319, %p320
      %p322 = scmp.ne.s32.totalorder %s313, %s314
      %p323 = scmp.eq.s32.totalorder %s30, 0
      %p324 = por %p322, %p323
      %p325 = scmp.ne.s32.totalorder %s313, %s314
      %p326 = scmp.eq.s32.totalorder %s31, 1
      %p327 = por %p325, %p326
      %p329 = scmp.ne.s32.totalorder %s314, %s328
      %p330 = scmp.eq.s32.totalorder %s31, 0
      %p331 = por %p329, %p330
      %s333 = sadd.s32 %s332, 1
      %p336 = scmp.eq.s32.totalorder %s25, 1
      %p337 = scmp.ne.s32.totalorder %s332, %s334
      %p338 = scmp.eq.s32.totalorder %s25, 0
      %p339 = por %p337, %p338
      %p340 = scmp.ne.s32.totalorder %s332, %s334
      %p341 = scmp.eq.s32.totalorder %s30, 1
      %p342 = por %p340, %p341
      %p343 = scmp.ne.s32.totalorder %s334, %s335
      %p344 = scmp.eq.s32.totalorder %s30, 0
      %p345 = por %p343, %p344
      %p346 = scmp.ne.s32.totalorder %s334, %s335
      %p347 = scmp.eq.s32.totalorder %s31, 1
      %p348 = por %p346, %p347
      %p350 = scmp.ne.s32.totalorder %s335, %s349
      %p351 = scmp.eq.s32.totalorder %s31, 0
      %p352 = por %p350, %p351
      %s354 = sadd.s32 %s353, 1
      %p357 = scmp.eq.s32.totalorder %s25, 1
      %p358 = scmp.ne.s32.totalorder %s353, %s355
      %p359 = scmp.eq.s32.totalorder %s25, 0
      %p360 = por %p358, %p359
      %p361 = scmp.ne.s32.totalorder %s353, %s355
      %p362 = scmp.eq.s32.totalorder %s30, 1
      %p363 = por %p361, %p362
      %p364 = scmp.ne.s32.totalorder %s355, %s356
      %p365 = scmp.eq.s32.totalorder %s30, 0
      %p366 = por %p364, %p365
      %p367 = scmp.ne.s32.totalorder %s355, %s356
      %p368 = scmp.eq.s32.totalorder %s31, 1
      %p369 = por %p367, %p368
      %p371 = scmp.ne.s32.totalorder %s356, %s370
      %p372 = scmp.eq.s32.totalorder %s31, 0
      %p373 = por %p371, %p372
      %s375 = sadd.s32 %s374, 1
      %p378 = scmp.eq.s32.totalorder %s25, 1
      %p379 = scmp.ne.s32.totalorder %s374, %s376
      %p380 = scmp.eq.s32.totalorder %s25, 0
      %p381 = por %p379, %p380
      %p382 = scmp.ne.s32.totalorder %s374, %s376
      %p383 = scmp.eq.s32.totalorder %s30, 1
      %p384 = por %p382, %p383
      %p385 = scmp.ne.s32.totalorder %s376, %s377
      %p386 = scmp.eq.s32.totalorder %s30, 0
      %p387 = por %p385, %p386
      %p388 = scmp.ne.s32.totalorder %s376, %s377
      %p389 = scmp.eq.s32.totalorder %s31, 1
      %p390 = por %p388, %p389
      %p392 = scmp.ne.s32.totalorder %s377, %s391
      %p393 = scmp.eq.s32.totalorder %s31, 0
      %p394 = por %p392, %p393
      %s395 = ssub.s32 %s25, %s32
      %p396 = scmp.eq.s32.totalorder %s395, 0
      %s398 = sadd.s32 %s397, 1
      %s399 = scalar_select %p396, %s397, %s398
      %p402 = pneg %p396
      %p403 = scmp.eq.s32.totalorder %s25, 1
      %p404 = por %p402, %p403
      %p405 = scmp.ne.s32.totalorder %s397, %s400
      %p406 = scmp.eq.s32.totalorder %s25, 0
      %p407 = por %p405, %p406
      %p408 = scmp.ne.s32.totalorder %s397, %s400
      %p409 = scmp.eq.s32.totalorder %s30, 1
      %p410 = por %p408, %p409
      %p411 = scmp.ne.s32.totalorder %s400, %s401
      %p412 = scmp.eq.s32.totalorder %s30, 0
      %p413 = por %p411, %p412
      %p414 = scmp.ne.s32.totalorder %s400, %s401
      %p415 = scmp.eq.s32.totalorder %s31, 1
      %p416 = por %p414, %p415
      %p418 = scmp.ne.s32.totalorder %s401, %s417
      %p419 = scmp.eq.s32.totalorder %s31, 0
      %p420 = por %p418, %p419
      %p421 = scmp.le.s32.totalorder 1, %s25
      %p422 = scmp.lt.s32.totalorder %s25, 3
      %p423 = pnand %p421, %p422
      %p424 = pneg %p423
      // Predicated region
      $region9: #{tpu_custom_call.1} parent=5 // pred_check
        _
      $region10: #{tpu_custom_call.1} parent=5 // pred_check_branch
        %426 = sbr.rel (%p423) target = $region12
      $region11: #{tpu_custom_call.1} parent=5 // pred_region
        %s427 = ssub.s32 %s25, 1
        // Predicated region
        $region13: #{tpu_custom_call.1} parent=11 // pred_check
          %p428 = pneg %p72
        $region14: #{tpu_custom_call.1} parent=11 // pred_check_branch
          %430 = sbr.rel (%p428) target = $region16
        $region15: #{tpu_custom_call.1} parent=11 // pred_region
          _
        $region16: #{tpu_custom_call.1} parent=11 // pred_fallthru
          _
        // Predicated region
        $region17: #{tpu_custom_call.1} parent=11 // pred_check
          %p431 = pneg %p93
        $region18: #{tpu_custom_call.1} parent=11 // pred_check_branch
          %433 = sbr.rel (%p431) target = $region20
        $region19: #{tpu_custom_call.1} parent=11 // pred_region
          %435 = vsyncadd [#allocation5], 0
          %s437 = sshll.u32 %s2, 4
          %s438 = int_to_ptr.hbm [resolvable:$true] %s437
          %s439 = sshll.u32 [#allocation4], 4
          %s440 = int_to_ptr.vmem [resolvable:$true] %s439
          %442 = dma.hbm_to_vmem [thread:$0]  %s438, 16, %s440, [#allocation5]
        $region20: #{tpu_custom_call.1} parent=11 // pred_fallthru
          _
        // Predicated region
        $region21: #{tpu_custom_call.1} parent=11 // pred_check
          %p443 = pneg %p114
        $region22: #{tpu_custom_call.1} parent=11 // pred_check_branch
          %445 = sbr.rel (%p443) target = $region24
        $region23: #{tpu_custom_call.1} parent=11 // pred_region
          _
        $region24: #{tpu_custom_call.1} parent=11 // pred_fallthru
          _
        // Predicated region
        $region25: #{tpu_custom_call.1} parent=11 // pred_check
          %p446 = pneg %p135
        $region26: #{tpu_custom_call.1} parent=11 // pred_check_branch
          %448 = sbr.rel (%p446) target = $region28
        $region27: #{tpu_custom_call.1} parent=11 // pred_region
          %450 = vsyncadd [#allocation7], 0
          %s452 = sshll.u32 %s4, 4
          %s453 = int_to_ptr.hbm [resolvable:$true] %s452
          %s454 = sshll.u32 [#allocation6], 4
          %s455 = int_to_ptr.vmem [resolvable:$true] %s454
          %457 = dma.hbm_to_vmem [thread:$0]  %s453, 16, %s455, [#allocation7]
        $region28: #{tpu_custom_call.1} parent=11 // pred_fallthru
          _
        // Predicated region
        $region29: #{tpu_custom_call.1} parent=11 // pred_check
          %p458 = pneg %p156
        $region30: #{tpu_custom_call.1} parent=11 // pred_check_branch
          %460 = sbr.rel (%p458) target = $region32
        $region31: #{tpu_custom_call.1} parent=11 // pred_region
          _
        $region32: #{tpu_custom_call.1} parent=11 // pred_fallthru
          _
        // Predicated region
        $region33: #{tpu_custom_call.1} parent=11 // pred_check
          %p461 = pneg %p177
        $region34: #{tpu_custom_call.1} parent=11 // pred_check_branch
          %463 = sbr.rel (%p461) target = $region36
        $region35: #{tpu_custom_call.1} parent=11 // pred_region
          _
        $region36: #{tpu_custom_call.1} parent=11 // pred_fallthru
          _
        // Predicated region
        $region37: #{tpu_custom_call.1} parent=11 // pred_check
          %p464 = pneg %p198
        $region38: #{tpu_custom_call.1} parent=11 // pred_check_branch
          %466 = sbr.rel (%p464) target = $region40
        $region39: #{tpu_custom_call.1} parent=11 // pred_region
          _
        $region40: #{tpu_custom_call.1} parent=11 // pred_fallthru
          _
        // Predicated region
        $region41: #{tpu_custom_call.1} parent=11 // pred_check
          %p467 = pneg %p219
        $region42: #{tpu_custom_call.1} parent=11 // pred_check_branch
          %469 = sbr.rel (%p467) target = $region44
        $region43: #{tpu_custom_call.1} parent=11 // pred_region
          _
        $region44: #{tpu_custom_call.1} parent=11 // pred_fallthru
          _
        // Predicated region
        $region45: #{tpu_custom_call.1} parent=11 // pred_check
          %p470 = pneg %p240
        $region46: #{tpu_custom_call.1} parent=11 // pred_check_branch
          %472 = sbr.rel (%p470) target = $region48
        $region47: #{tpu_custom_call.1} parent=11 // pred_region
          _
        $region48: #{tpu_custom_call.1} parent=11 // pred_fallthru
          _
        // Predicated region
        $region49: #{tpu_custom_call.1} parent=11 // pred_check
          %p473 = pneg %p261
        $region50: #{tpu_custom_call.1} parent=11 // pred_check_branch
          %475 = sbr.rel (%p473) target = $region52
        $region51: #{tpu_custom_call.1} parent=11 // pred_region
          _
        $region52: #{tpu_custom_call.1} parent=11 // pred_fallthru
          _
        // Predicated region
        $region53: #{tpu_custom_call.1} parent=11 // pred_check
          %p476 = pneg %p282
        $region54: #{tpu_custom_call.1} parent=11 // pred_check_branch
          %478 = sbr.rel (%p476) target = $region56
        $region55: #{tpu_custom_call.1} parent=11 // pred_region
          _
        $region56: #{tpu_custom_call.1} parent=11 // pred_fallthru
          _
        // Predicated region
        $region57: #{tpu_custom_call.1} parent=11 // pred_check
          %p479 = pneg %p303
        $region58: #{tpu_custom_call.1} parent=11 // pred_check_branch
          %481 = sbr.rel (%p479) target = $region60
        $region59: #{tpu_custom_call.1} parent=11 // pred_region
          _
        $region60: #{tpu_custom_call.1} parent=11 // pred_fallthru
          _
        // Predicated region
        $region61: #{tpu_custom_call.1} parent=11 // pred_check
          %p482 = pneg %p324
        $region62: #{tpu_custom_call.1} parent=11 // pred_check_branch
          %484 = sbr.rel (%p482) target = $region64
        $region63: #{tpu_custom_call.1} parent=11 // pred_region
          _
        $region64: #{tpu_custom_call.1} parent=11 // pred_fallthru
          _
        // Predicated region
        $region65: #{tpu_custom_call.1} parent=11 // pred_check
          %p485 = pneg %p345
        $region66: #{tpu_custom_call.1} parent=11 // pred_check_branch
          %487 = sbr.rel (%p485) target = $region68
        $region67: #{tpu_custom_call.1} parent=11 // pred_region
          _
        $region68: #{tpu_custom_call.1} parent=11 // pred_fallthru
          _
        // Predicated region
        $region69: #{tpu_custom_call.1} parent=11 // pred_check
          %p488 = pneg %p366
        $region70: #{tpu_custom_call.1} parent=11 // pred_check_branch
          %490 = sbr.rel (%p488) target = $region72
        $region71: #{tpu_custom_call.1} parent=11 // pred_region
          _
        $region72: #{tpu_custom_call.1} parent=11 // pred_fallthru
          _
        // Predicated region
        $region73: #{tpu_custom_call.1} parent=11 // pred_check
          %p491 = pneg %p387
        $region74: #{tpu_custom_call.1} parent=11 // pred_check_branch
          %493 = sbr.rel (%p491) target = $region76
        $region75: #{tpu_custom_call.1} parent=11 // pred_region
          _
        $region76: #{tpu_custom_call.1} parent=11 // pred_fallthru
          _
      $region12: #{tpu_custom_call.1} parent=5 // pred_fallthru
        _
      %p494 = scmp.lt.s32.totalorder %s25, 2
      // Predicated region
      $region77: #{tpu_custom_call.1} parent=5 // pred_check
        %p495 = pneg %p494
      $region78: #{tpu_custom_call.1} parent=5 // pred_check_branch
        %497 = sbr.rel (%p495) target = $region80
      $region79: #{tpu_custom_call.1} parent=5 // pred_region
        // Predicated region
        $region81: #{tpu_custom_call.1} parent=79 // pred_check
          %p498 = pneg %p45
        $region82: #{tpu_custom_call.1} parent=79 // pred_check_branch
          %500 = sbr.rel (%p498) target = $region84
        $region83: #{tpu_custom_call.1} parent=79 // pred_region
          %p501 = scmp.lt.s32.totalorder %s25, 1
          %s502 = scalar_select %p501, %s25, 1
          %s503 = smul.addr %s502, 2
          %s504 = smul.addr %s503, 8
          %s505 = scalar_lea.vmem %s0, %s504
        $region84: #{tpu_custom_call.1} parent=79 // pred_fallthru
          _
      $region80: #{tpu_custom_call.1} parent=5 // pred_fallthru
        _
      %p506 = scmp.le.s32.totalorder 1, %s25
      %p507 = scmp.lt.s32.totalorder %s25, 3
      %p508 = pnand %p506, %p507
      %p509 = pneg %p508
      // Predicated region
      $region85: #{tpu_custom_call.1} parent=5 // pred_check
        _
      $region86: #{tpu_custom_call.1} parent=5 // pred_check_branch
        %511 = sbr.rel (%p508) target = $region88
      $region87: #{tpu_custom_call.1} parent=5 // pred_region
        %s512 = ssub.s32 %s25, 1
        // Predicated region
        $region89: #{tpu_custom_call.1} parent=87 // pred_check
          %p513 = pneg %p93
        $region90: #{tpu_custom_call.1} parent=87 // pred_check_branch
          %515 = sbr.rel (%p513) target = $region92
        $region91: #{tpu_custom_call.1} parent=87 // pred_region
          %517 = dma.done [#allocation5], 16
        $region92: #{tpu_custom_call.1} parent=87 // pred_fallthru
          _
        // Predicated region
        $region93: #{tpu_custom_call.1} parent=87 // pred_check
          %p518 = pneg %p135
        $region94: #{tpu_custom_call.1} parent=87 // pred_check_branch
          %520 = sbr.rel (%p518) target = $region96
        $region95: #{tpu_custom_call.1} parent=87 // pred_region
          %522 = dma.done [#allocation7], 16
        $region96: #{tpu_custom_call.1} parent=87 // pred_fallthru
          _
        %p523 = scmp.lt.s32.totalorder %s30, 1
        %s524 = scalar_select %p523, %s30, 1
        %s525 = smul.addr %s524, 2
        %s526 = smul.addr %s525, 8
        %s527 = scalar_lea.vmem %s0, %s526
        %p528 = pneg %p51
        %p529 = pneg %p48
        %p530 = pneg %p72
        %p531 = pneg %p69
        %p532 = pneg %p93
        %p533 = pneg %p90
        %p534 = pneg %p114
        %p535 = pneg %p111
        %p536 = pneg %p135
        %p537 = pneg %p132
        %p538 = pneg %p156
        %p539 = pneg %p153
        %p540 = pneg %p177
        %p541 = pneg %p174
        %p542 = pneg %p198
        %p543 = pneg %p195
        %p544 = pneg %p219
        %p545 = pneg %p216
        %p546 = pneg %p240
        %p547 = pneg %p237
        %p548 = pneg %p261
        %p549 = pneg %p258
        %p550 = pneg %p282
        %p551 = pneg %p279
        %p552 = pneg %p303
        %p553 = pneg %p300
        %p554 = pneg %p324
        %p555 = pneg %p321
        %p556 = pneg %p345
        %p557 = pneg %p342
        %p558 = pneg %p366
        %p559 = pneg %p363
        %p560 = pneg %p387
        %p561 = pneg %p384
        %p562 = pneg %p413
        %p563 = pneg %p410
        %p564 = scmp.lt.s32.totalorder %s30, 1
        %s565 = scalar_select %p564, %s30, 1
        %s566 = smul.addr %s565, 6
        %s567 = smul.addr %s566, 8
        %s568 = scalar_lea.vmem %s17, %s567
        %p569 = scmp.lt.s32.totalorder %s30, 1
        %s570 = scalar_select %p569, %s30, 1
        %s571 = smul.addr %s570, 2
        %s572 = smul.addr %s571, 8
        %s573 = scalar_lea.vmem %s0, %s572
        %p574 = scmp.lt.s32.totalorder %s30, 1
        %s575 = scalar_select %p574, %s30, 1
        %s576 = smul.addr %s575, 6
        %s577 = smul.addr %s576, 8
        %s578 = scalar_lea.vmem %s17, %s577
        %v579 = vld [vmem:[%s573] sm:$0xff]
        %v580 = vld [vmem:[%s573 + $0x8] sm:$0xff]
        %v581 = vld [vmem:[%s1] sm:$0xf]
        %v582 = vld [vmem:[#allocation4] sm:$0x1]
        %v584 = vperm.slane %v582, 0
        %vm586 = vcmask 31744
        %v588 = vsel %vm586, %v579, 0
        %v591 = vsel %vm586, %v580, 0
        %vm593 = vcmask 1043456
        %v595 = vsel %vm593, %v581, 0
        %597 = vmatpush.msra.mxu0 0.0
        %598 = vmatpush.msra.mxu0 0.0
        %599 = vmatpush.msra.mxu0 0.0
        %600 = vmatpush.msra.mxu0 0.0
        %601 = vmatpush.msra.mxu0 0.0
        %602 = vmatpush.msra.mxu0 0.0
        %603 = vmatpush.msra.mxu0 0.0
        %604 = vmatpush.msra.mxu0 0.0
        %605 = vmatpush.msra.mxu0 0.0
        %606 = vmatpush.msra.mxu0 0.0
        %607 = vmatpush.msra.mxu0 0.0
        %608 = vmatpush.msra.mxu0 0.0
        %609 = vmatpush.msra.mxu0 0.0
        %610 = vmatpush.msra.mxu0 0.0
        %611 = vmatpush.msra.mxu0 0.0
        %612 = vmatpush.msra.mxu0 %v595
        %613 = vmatmul.f32.gmra.mxu0 %v588
        %v614 = vpop.f32.mrf.mxu0
        %v615 = vadd.f32 %v584, %v614
        %616 = vmatmul.f32.gmra.mxu0 %v591
        %v617 = vpop.f32.mrf.mxu0
        %v618 = vadd.f32 %v584, %v617
        %619 = vdwg.mxu0
        %vm620 = vcmask 64512
        %621 = vst.msk [vmem:[#allocation2] sm:$0xff] %vm620, 0.0
        %622 = vst.msk [vmem:[#allocation2 + $0x18] sm:$0xff] %vm620, 0.0
        %623 = vst.msk [vmem:[#allocation2 + $0x8] sm:$0xff] %vm620, %v615
        %624 = vst.msk [vmem:[#allocation2 + $0x10] sm:$0xff] %vm620, %v618
        %v625 = vld [vmem:[%s3] sm:$0x1f]
        %v626 = vld [vmem:[#allocation2 + $0x6] sm:$0xff]
        %v627 = vld [vmem:[#allocation2 + $0xe] sm:$0xff]
        %v628 = vperm.slane %v625, 0
        %v629 = vmul.f32 %v626, %v628
        %v630 = vmul.f32 %v627, %v628
        %v631 = vadd.f32 %v629, 0.0
        %v632 = vadd.f32 %v630, 0.0
        %v633 = vld [vmem:[#allocation2 + $0x7] sm:$0xff]
        %v634 = vld [vmem:[#allocation2 + $0xf] sm:$0xff]
        %v635 = vperm.slane %v625, 1
        %v636 = vmul.f32 %v633, %v635
        %v637 = vmul.f32 %v634, %v635
        %v638 = vadd.f32 %v631, %v636
        %v639 = vadd.f32 %v632, %v637
        %v640 = vld [vmem:[#allocation2 + $0x8] sm:$0xff]
        %v641 = vld [vmem:[#allocation2 + $0x10] sm:$0xff]
        %v642 = vperm.slane %v625, 2
        %v643 = vmul.f32 %v640, %v642
        %v644 = vmul.f32 %v641, %v642
        %v645 = vadd.f32 %v638, %v643
        %v646 = vadd.f32 %v639, %v644
        %v647 = vld [vmem:[#allocation2 + $0x9] sm:$0xff]
        %v648 = vld [vmem:[#allocation2 + $0x11] sm:$0xff]
        %v649 = vperm.slane %v625, 3
        %v650 = vmul.f32 %v647, %v649
        %v651 = vmul.f32 %v648, %v649
        %v652 = vadd.f32 %v645, %v650
        %v653 = vadd.f32 %v646, %v651
        %v654 = vld [vmem:[#allocation2 + $0xa] sm:$0xff]
        %v655 = vld [vmem:[#allocation2 + $0x12] sm:$0xff]
        %v656 = vperm.slane %v625, 4
        %v657 = vmul.f32 %v654, %v656
        %v658 = vmul.f32 %v655, %v656
        %v659 = vadd.f32 %v652, %v657
        %v660 = vadd.f32 %v653, %v658
        %v661 = vld [vmem:[#allocation6] sm:$0x1]
        %v663 = vperm.slane %v661, 0
        %v665 = vadd.f32 %v659, %v663
        %v666 = vadd.f32 %v660, %v663
        %667 = vst.msk [vmem:[#allocation2 + $0x8] sm:$0xff] %vm620, %v665
        %668 = vst.msk [vmem:[#allocation2 + $0x10] sm:$0xff] %vm620, %v666
        %v669 = vld [vmem:[%s5] sm:$0x7]
        %v670 = vld [vmem:[#allocation2 + $0x5] sm:$0xff]
        %v671 = vld [vmem:[#allocation2 + $0xd] sm:$0xff]
        %v672 = vperm.slane %v669, 0
        %v673 = vmul.f32 %v670, %v672
        %v674 = vmul.f32 %v671, %v672
        %v675 = vadd.f32 %v673, 0.0
        %v676 = vadd.f32 %v674, 0.0
        %v677 = vld [vmem:[#allocation2 + $0x8] sm:$0xff]
        %v678 = vld [vmem:[#allocation2 + $0x10] sm:$0xff]
        %v679 = vperm.slane %v669, 1
        %v680 = vmul.f32 %v677, %v679
        %v681 = vmul.f32 %v678, %v679
        %v682 = vadd.f32 %v675, %v680
        %v683 = vadd.f32 %v676, %v681
        %v684 = vld [vmem:[#allocation2 + $0xb] sm:$0xff]
        %v685 = vld [vmem:[#allocation2 + $0x13] sm:$0xff]
        %v686 = vperm.slane %v669, 2
        %v687 = vmul.f32 %v684, %v686
        %v688 = vmul.f32 %v685, %v686
        %v689 = vadd.f32 %v682, %v687
        %v690 = vadd.f32 %v683, %v688
        %v691 = vld [vmem:[%s6] sm:$0x1]
        %v693 = vperm.slane %v691, 0
        %v695 = vadd.f32 %v689, %v693
        %v696 = vadd.f32 %v690, %v693
        %v697 = vld [vmem:[%s7] sm:$0xff]
        %v698 = vld [vmem:[%s8] sm:$0x1]
        %v700 = vperm.slane %v698, 0
        %v703 = vsel %vm620, %v695, 0
        %v706 = vsel %vm620, %v696, 0
        %708 = vmatpush.msra.mxu0 0.0
        %709 = vmatpush.msra.mxu0 0.0
        %710 = vmatpush.msra.mxu0 0.0
        %711 = vmatpush.msra.mxu0 0.0
        %712 = vmatpush.msra.mxu0 0.0
        %713 = vmatpush.msra.mxu0 0.0
        %714 = vmatpush.msra.mxu0 0.0
        %715 = vmatpush.msra.mxu0 0.0
        %716 = vmatpush.msra.mxu0 0.0
        %717 = vmatpush.msra.mxu0 0.0
        %718 = vmatpush.msra.mxu0 0.0
        %719 = vmatpush.msra.mxu0 0.0
        %720 = vmatpush.msra.mxu0 0.0
        %721 = vmatpush.msra.mxu0 0.0
        %722 = vmatpush.msra.mxu0 0.0
        %723 = vmatpush.msra.mxu0 %v697
        %724 = vmatmul.f32.gmra.mxu0 %v703
        %v725 = vpop.f32.mrf.mxu0
        %v726 = vadd.f32 %v700, %v725
        %727 = vmatmul.f32.gmra.mxu0 %v706
        %v728 = vpop.f32.mrf.mxu0
        %v729 = vadd.f32 %v700, %v728
        %730 = vdwg.mxu0
        %731 = vst.msk [vmem:[%s578] sm:$0xff] %vm620, %v726
        %732 = vst.msk [vmem:[%s578 + $0x8] sm:$0xff] %vm620, %v729
        %733 = vst.msk [vmem:[#allocation2 + $0x8] sm:$0xff] %vm620, %v615
        %734 = vst.msk [vmem:[#allocation2 + $0x10] sm:$0xff] %vm620, %v618
        %v735 = vld [vmem:[%s9] sm:$0x7]
        %v736 = vld [vmem:[#allocation2 + $0x7] sm:$0xff]
        %v737 = vld [vmem:[#allocation2 + $0xf] sm:$0xff]
        %v738 = vperm.slane %v735, 0
        %v739 = vmul.f32 %v736, %v738
        %v740 = vmul.f32 %v737, %v738
        %v741 = vadd.f32 %v739, 0.0
        %v742 = vadd.f32 %v740, 0.0
        %v743 = vld [vmem:[#allocation2 + $0x8] sm:$0xff]
        %v744 = vld [vmem:[#allocation2 + $0x10] sm:$0xff]
        %v745 = vperm.slane %v735, 1
        %v746 = vmul.f32 %v743, %v745
        %v747 = vmul.f32 %v744, %v745
        %v748 = vadd.f32 %v741, %v746
        %v749 = vadd.f32 %v742, %v747
        %v750 = vld [vmem:[#allocation2 + $0x9] sm:$0xff]
        %v751 = vld [vmem:[#allocation2 + $0x11] sm:$0xff]
        %v752 = vperm.slane %v735, 2
        %v753 = vmul.f32 %v750, %v752
        %v754 = vmul.f32 %v751, %v752
        %v755 = vadd.f32 %v748, %v753
        %v756 = vadd.f32 %v749, %v754
        %v757 = vld [vmem:[%s10] sm:$0x1]
        %v759 = vperm.slane %v757, 0
        %v761 = vadd.f32 %v755, %v759
        %v762 = vadd.f32 %v756, %v759
        %763 = vst.msk [vmem:[#allocation2 + $0x8] sm:$0xff] %vm620, %v761
        %764 = vst.msk [vmem:[#allocation2 + $0x10] sm:$0xff] %vm620, %v762
        %v765 = vld [vmem:[%s11] sm:$0x7]
        %v766 = vld [vmem:[#allocation2 + $0x6] sm:$0xff]
        %v767 = vld [vmem:[#allocation2 + $0xe] sm:$0xff]
        %v768 = vperm.slane %v765, 0
        %v769 = vmul.f32 %v766, %v768
        %v770 = vmul.f32 %v767, %v768
        %v771 = vadd.f32 %v769, 0.0
        %v772 = vadd.f32 %v770, 0.0
        %v773 = vld [vmem:[#allocation2 + $0x8] sm:$0xff]
        %v774 = vld [vmem:[#allocation2 + $0x10] sm:$0xff]
        %v775 = vperm.slane %v765, 1
        %v776 = vmul.f32 %v773, %v775
        %v777 = vmul.f32 %v774, %v775
        %v778 = vadd.f32 %v771, %v776
        %v779 = vadd.f32 %v772, %v777
        %v780 = vld [vmem:[#allocation2 + $0xa] sm:$0xff]
        %v781 = vld [vmem:[#allocation2 + $0x12] sm:$0xff]
        %v782 = vperm.slane %v765, 2
        %v783 = vmul.f32 %v780, %v782
        %v784 = vmul.f32 %v781, %v782
        %v785 = vadd.f32 %v778, %v783
        %v786 = vadd.f32 %v779, %v784
        %v787 = vld [vmem:[%s12] sm:$0x1]
        %v789 = vperm.slane %v787, 0
        %v791 = vadd.f32 %v785, %v789
        %v792 = vadd.f32 %v786, %v789
        %v793 = vld [vmem:[%s13] sm:$0xff]
        %v794 = vld [vmem:[%s14] sm:$0x1]
        %v796 = vperm.slane %v794, 0
        %v799 = vsel %vm620, %v791, 0
        %v802 = vsel %vm620, %v792, 0
        %804 = vmatpush.msra.mxu0 0.0
        %805 = vmatpush.msra.mxu0 0.0
        %806 = vmatpush.msra.mxu0 0.0
        %807 = vmatpush.msra.mxu0 0.0
        %808 = vmatpush.msra.mxu0 0.0
        %809 = vmatpush.msra.mxu0 0.0
        %810 = vmatpush.msra.mxu0 0.0
        %811 = vmatpush.msra.mxu0 0.0
        %812 = vmatpush.msra.mxu0 0.0
        %813 = vmatpush.msra.mxu0 0.0
        %814 = vmatpush.msra.mxu0 0.0
        %815 = vmatpush.msra.mxu0 0.0
        %816 = vmatpush.msra.mxu0 0.0
        %817 = vmatpush.msra.mxu0 0.0
        %818 = vmatpush.msra.mxu0 0.0
        %819 = vmatpush.msra.mxu0 %v793
        %820 = vmatmul.f32.gmra.mxu0 %v799
        %v821 = vpop.f32.mrf.mxu0
        %v822 = vadd.f32 %v796, %v821
        %823 = vmatmul.f32.gmra.mxu0 %v802
        %v824 = vpop.f32.mrf.mxu0
        %v825 = vadd.f32 %v796, %v824
        %826 = vdwg.mxu0
        %s827 = scalar_lea.vmem %s578, 16
        %828 = vst.msk [vmem:[%s827] sm:$0xff] %vm620, %v822
        %829 = vst.msk [vmem:[%s827 + $0x8] sm:$0xff] %vm620, %v825
        %830 = vst.msk [vmem:[#allocation3] sm:$0xff] %vm586, -inf
        %831 = vst.msk [vmem:[#allocation3 + $0x18] sm:$0xff] %vm586, -inf
        %832 = vst.msk [vmem:[#allocation3 + $0x8] sm:$0xff] %vm586, %v579
        %833 = vst.msk [vmem:[#allocation3 + $0x10] sm:$0xff] %vm586, %v580
        %v834 = vld [vmem:[#allocation3 + $0x7] sm:$0xff]
        %v835 = vld [vmem:[#allocation3 + $0xf] sm:$0xff]
        %v836 = vld [vmem:[#allocation3 + $0x8] sm:$0xff]
        %v837 = vld [vmem:[#allocation3 + $0x10] sm:$0xff]
        %v838 = vmax.f32 %v834, %v836
        %v839 = vmax.f32 %v835, %v837
        %v840 = vld [vmem:[#allocation3 + $0x9] sm:$0xff]
        %v841 = vld [vmem:[#allocation3 + $0x11] sm:$0xff]
        %v842 = vmax.f32 %v838, %v840
        %v843 = vmax.f32 %v839, %v841
        %v844 = vld [vmem:[%s15] sm:$0xf]
        %v845 = vld [vmem:[%s16] sm:$0x1]
        %v847 = vperm.slane %v845, 0
        %v850 = vsel %vm586, %v842, 0
        %v853 = vsel %vm586, %v843, 0
        %v856 = vsel %vm593, %v844, 0
        %858 = vmatpush.msra.mxu0 0.0
        %859 = vmatpush.msra.mxu0 0.0
        %860 = vmatpush.msra.mxu0 0.0
        %861 = vmatpush.msra.mxu0 0.0
        %862 = vmatpush.msra.mxu0 0.0
        %863 = vmatpush.msra.mxu0 0.0
        %864 = vmatpush.msra.mxu0 0.0
        %865 = vmatpush.msra.mxu0 0.0
        %866 = vmatpush.msra.mxu0 0.0
        %867 = vmatpush.msra.mxu0 0.0
        %868 = vmatpush.msra.mxu0 0.0
        %869 = vmatpush.msra.mxu0 0.0
        %870 = vmatpush.msra.mxu0 0.0
        %871 = vmatpush.msra.mxu0 0.0
        %872 = vmatpush.msra.mxu0 0.0
        %873 = vmatpush.msra.mxu0 %v856
        %874 = vmatmul.f32.gmra.mxu0 %v850
        %v875 = vpop.f32.mrf.mxu0
        %v876 = vadd.f32 %v847, %v875
        %877 = vmatmul.f32.gmra.mxu0 %v853
        %v878 = vpop.f32.mrf.mxu0
        %v879 = vadd.f32 %v847, %v878
        %880 = vdwg.mxu0
        %s881 = scalar_lea.vmem %s578, 32
        %882 = vst.msk [vmem:[%s881] sm:$0xff] %vm620, %v876
        %883 = vst.msk [vmem:[%s881 + $0x8] sm:$0xff] %vm620, %v879
        %p884 = scmp.lt.s32.totalorder %s30, 1
        %s885 = scalar_select %p884, %s30, 1
        %s886 = smul.addr %s885, 6
        %s887 = smul.addr %s886, 8
        %s888 = scalar_lea.vmem %s17, %s887
        // Predicated region
        $region97: #{tpu_custom_call.1} parent=87 // pred_check
          %p889 = pneg %p410
        $region98: #{tpu_custom_call.1} parent=87 // pred_check_branch
          %891 = sbr.rel (%p889) target = $region100
        $region99: #{tpu_custom_call.1} parent=87 // pred_region
          _
        $region100: #{tpu_custom_call.1} parent=87 // pred_fallthru
          _
      $region88: #{tpu_custom_call.1} parent=5 // pred_fallthru
        _
      %p892 = scmp.le.s32.totalorder 2, %s25
      // Predicated region
      $region101: #{tpu_custom_call.1} parent=5 // pred_check
        %p893 = pneg %p892
      $region102: #{tpu_custom_call.1} parent=5 // pred_check_branch
        %895 = sbr.rel (%p893) target = $region104
      $region103: #{tpu_custom_call.1} parent=5 // pred_region
        %s896 = ssub.s32 %s25, 2
        // Predicated region
        $region105: #{tpu_custom_call.1} parent=103 // pred_check
          %p897 = pneg %p416
        $region106: #{tpu_custom_call.1} parent=103 // pred_check_branch
          %899 = sbr.rel (%p897) target = $region108
        $region107: #{tpu_custom_call.1} parent=103 // pred_region
          %p900 = scmp.lt.s32.totalorder %s31, 1
          %s901 = scalar_select %p900, %s31, 1
          %s902 = smul.addr %s901, 6
          %s903 = smul.addr %s902, 8
          %s904 = scalar_lea.vmem %s17, %s903
        $region108: #{tpu_custom_call.1} parent=103 // pred_fallthru
          _
      $region104: #{tpu_custom_call.1} parent=5 // pred_fallthru
        _
    $region6: #{tpu_custom_call.1} parent=1 // loop_footer
      %s29 = sadd.s32 1, %s25
    $region7: #{tpu_custom_call.1} parent=1 // loop_footer_branch
      %24 = sbr.rel target = $region3
    $region8: #{tpu_custom_call.1} parent=1 // loop_exit
      _
    %905 = vsyncpa [#allocation5], 1
    %s906 = scalar_lea.sflag [#allocation5], 1
    %907 = vsyncpa %s906, 1
    %908 = vsyncpa [#allocation7], 1

</llo_original>
